<compile_context>
chip_gen: v7x
topology: tpu7x:2x2x1
jax: 0.10.0
libtpu: 0.0.40
codegen_flags: <defaults>
</compile_context>

<pallas_src>
import jax
import jax.numpy as jnp
from jax.experimental import pallas as pl
from jax.experimental.pallas import tpu as pltpu

IN_FEATURES = 22
HIDDEN = 64
OUT_FEATURES = 128

# Default row-tile size; a multiple of 8 (sublane), large enough to amortize
# the ~0.35us per-grid-step overhead, small enough for v5e's 16 MiB scoped
# VMEM even with double-buffering of input + output tiles.
DEFAULT_TM = 4096


def _sensor_mlp_kernel(x_ref, w1_ref, b1_ref, w2_ref, b2_ref, o_ref):
    # x_ref : (TM, 22)   w1_ref : (22, 64)   b1_ref : (1, 64)
    # w2_ref: (64, 128)  b2_ref : (1, 128)   o_ref  : (TM, 128)
    x = x_ref[...]

    # Linear #1 (MXU matmul, f32 accumulation) + bias
    h = jnp.dot(x, w1_ref[...], preferred_element_type=jnp.float32) + b1_ref[...]

    # LeakyReLU (PyTorch default negative_slope = 0.01) -- VPU, free filler
    # under the DMA-bound regime.
    h = jnp.where(h > 0, h, 0.01 * h)

    # Linear #2 + bias
    y = jnp.dot(h, w2_ref[...], preferred_element_type=jnp.float32) + b2_ref[...]

    o_ref[...] = y.astype(o_ref.dtype)


def _round_up(x: int, m: int) -> int:
    return ((x + m - 1) // m) * m


def sensor_model_forward(x, w1, b1, w2, b2, *, tm: int = DEFAULT_TM):
    """x: (batch, seq, 22) float32. Returns (batch, seq, 128) float32.

    w1: (22, 64), b1: (64,), w2: (64, 128), b2: (128,)  -- already transposed
    to [in, out] layout (PyTorch nn.Linear stores [out, in]).
    """
    batch, seq, feat = x.shape
    assert feat == IN_FEATURES
    m = batch * seq

    # Pick the effective tile: don't tile larger than the (padded) problem.
    tm_eff = min(tm, _round_up(m, 8))
    tm_eff = _round_up(tm_eff, 8)

    # Pad M up to a multiple of the tile so every block is (8,128)-aligned
    # and the last tile needs no masked stores.
    m_padded = _round_up(m, tm_eff)

    x2d = x.reshape(m, feat)
    if m_padded != m:
        x2d = jnp.pad(x2d, ((0, m_padded - m), (0, 0)))

    b1_2d = b1.reshape(1, HIDDEN)
    b2_2d = b2.reshape(1, OUT_FEATURES)

    grid_m = m_padded // tm_eff

    cost = pl.CostEstimate(
        flops=2 * m_padded * (IN_FEATURES * HIDDEN + HIDDEN * OUT_FEATURES),
        bytes_accessed=m_padded * (IN_FEATURES + OUT_FEATURES) * 4
        + (IN_FEATURES * HIDDEN + HIDDEN + HIDDEN * OUT_FEATURES + OUT_FEATURES) * 4,
        transcendentals=0,
    )

    out2d = pl.pallas_call(
        _sensor_mlp_kernel,
        out_shape=jax.ShapeDtypeStruct((m_padded, OUT_FEATURES), jnp.float32),
        grid_spec=pl.GridSpec(
            grid=(grid_m,),
            in_specs=[
                # Row tile of the input: marches down M.
                pl.BlockSpec((tm_eff, feat), lambda i: (i, 0)),
                # Weights / biases: constant index_map -> resident in VMEM.
                pl.BlockSpec((feat, HIDDEN), lambda i: (0, 0)),
                pl.BlockSpec((1, HIDDEN), lambda i: (0, 0)),
                pl.BlockSpec((HIDDEN, OUT_FEATURES), lambda i: (0, 0)),
                pl.BlockSpec((1, OUT_FEATURES), lambda i: (0, 0)),
            ],
            out_specs=pl.BlockSpec((tm_eff, OUT_FEATURES), lambda i: (i, 0)),
        ),
        compiler_params=pltpu.CompilerParams(
            # Row tiles are independent -> shard across TensorCores on v7x.
            dimension_semantics=("parallel",),
        ),
        cost_estimate=cost,
    )(x2d, w1, b1_2d, w2, b2_2d)

    if m_padded != m:
        out2d = out2d[:m]
    return out2d.reshape(batch, seq, OUT_FEATURES)


def _reference_forward(x, w1, b1, w2, b2):
    """Plain-JAX reference of the PyTorch forward."""
    batch, seq, feat = x.shape
    h = x.reshape(-1, feat) @ w1 + b1
    h = jnp.where(h > 0, h, 0.01 * h)
    y = h @ w2 + b2
    return y.reshape(batch, seq, OUT_FEATURES)


if __name__ == "__main__":
    key = jax.random.PRNGKey(0)
    k_x, k_w1, k_b1, k_w2, k_b2 = jax.random.split(key, 5)

    batch, seq, feat = 2, 8, IN_FEATURES

    # Deterministic synthetic parameters (roughly matching nn.Linear init scale).
    x = jax.random.normal(k_x, (batch, seq, feat), dtype=jnp.float32)
    w1 = jax.random.uniform(k_w1, (feat, HIDDEN), jnp.float32, -1.0, 1.0) / jnp.sqrt(feat)
    b1 = jax.random.uniform(k_b1, (HIDDEN,), jnp.float32, -1.0, 1.0) / jnp.sqrt(feat)
    w2 = jax.random.uniform(k_w2, (HIDDEN, OUT_FEATURES), jnp.float32, -1.0, 1.0) / jnp.sqrt(64.0)
    b2 = jax.random.uniform(k_b2, (OUT_FEATURES,), jnp.float32, -1.0, 1.0) / jnp.sqrt(64.0)

    out = sensor_model_forward(x, w1, b1, w2, b2)
    out = jax.block_until_ready(out)

    ref = _reference_forward(x, w1, b1, w2, b2)
    assert out.shape == (batch, seq, OUT_FEATURES)
    assert jnp.allclose(out, ref, atol=1e-5, rtol=1e-5), "mismatch vs reference"

    print("KERNEL_OK")
</pallas_src>

<mosaic_0001>
module attributes {stable_mosaic.version = 11 : i64} {
  func.func @_sensor_mlp_kernel(%arg0: i32, %arg1: memref<16x22xf32, #tpu.memory_space<vmem>>, %arg2: memref<22x64xf32, #tpu.memory_space<vmem>>, %arg3: memref<1x64xf32, #tpu.memory_space<vmem>>, %arg4: memref<64x128xf32, #tpu.memory_space<vmem>>, %arg5: memref<1x128xf32, #tpu.memory_space<vmem>>, %arg6: memref<16x128xf32, #tpu.memory_space<vmem>>) attributes {dimension_semantics = [#tpu.dimension_semantics<parallel>], iteration_bounds = array<i64: 1>, scalar_prefetch = 0 : i64, scratch_operands = 0 : i64, tpu.core_type = #tpu.core_type<tc>, window_params = [{transform_indices = @transform_0, window_bounds = array<i64: 16, 22>}, {pipeline_mode = #tpu.pipeline_mode<synchronous>, transform_indices = @transform_1, window_bounds = array<i64: 22, 64>}, {pipeline_mode = #tpu.pipeline_mode<synchronous>, transform_indices = @transform_2, window_bounds = array<i64: 1, 64>}, {pipeline_mode = #tpu.pipeline_mode<synchronous>, transform_indices = @transform_3, window_bounds = array<i64: 64, 128>}, {pipeline_mode = #tpu.pipeline_mode<synchronous>, transform_indices = @transform_4, window_bounds = array<i64: 1, 128>}, {transform_indices = @transform_5, window_bounds = array<i64: 16, 128>}]} {
    %c0 = arith.constant 0 : index
    %c0_0 = arith.constant 0 : index
    %0 = vector.load %arg1[%c0, %c0_0] : memref<16x22xf32, #tpu.memory_space<vmem>>, vector<16x22xf32>
    %c0_1 = arith.constant 0 : index
    %c0_2 = arith.constant 0 : index
    %1 = vector.load %arg2[%c0_1, %c0_2] : memref<22x64xf32, #tpu.memory_space<vmem>>, vector<22x64xf32>
    %cst = arith.constant dense<0.000000e+00> : vector<16x64xf32>
    %2 = tpu.matmul %0, %1, %cst {dimension_numbers = #tpu.dot_dimension_numbers<[1], [0], [0], [1], [0, 0, 1, 1], [], []>} : vector<16x22xf32>, vector<22x64xf32>, vector<16x64xf32> -> vector<16x64xf32>
    %c0_3 = arith.constant 0 : index
    %c0_4 = arith.constant 0 : index
    %3 = vector.load %arg3[%c0_3, %c0_4] : memref<1x64xf32, #tpu.memory_space<vmem>>, vector<1x64xf32>
    %4 = vector.broadcast %3 : vector<1x64xf32> to vector<16x64xf32>
    %5 = arith.addf %2, %4 : vector<16x64xf32>
    %cst_5 = arith.constant 0.000000e+00 : f32
    %6 = vector.broadcast %cst_5 : f32 to vector<16x64xf32>
    %7 = arith.cmpf ogt, %5, %6 : vector<16x64xf32>
    %cst_6 = arith.constant 0.00999999977 : f32
    %8 = vector.broadcast %cst_6 : f32 to vector<16x64xf32>
    %9 = arith.mulf %8, %5 : vector<16x64xf32>
    %10 = arith.select %7, %5, %9 : vector<16x64xi1>, vector<16x64xf32>
    %c0_7 = arith.constant 0 : index
    %c0_8 = arith.constant 0 : index
    %11 = vector.load %arg4[%c0_7, %c0_8] : memref<64x128xf32, #tpu.memory_space<vmem>>, vector<64x128xf32>
    %cst_9 = arith.constant dense<0.000000e+00> : vector<16x128xf32>
    %12 = tpu.matmul %10, %11, %cst_9 {dimension_numbers = #tpu.dot_dimension_numbers<[1], [0], [0], [1], [0, 0, 1, 1], [], []>} : vector<16x64xf32>, vector<64x128xf32>, vector<16x128xf32> -> vector<16x128xf32>
    %c0_10 = arith.constant 0 : index
    %c0_11 = arith.constant 0 : index
    %13 = vector.load %arg5[%c0_10, %c0_11] : memref<1x128xf32, #tpu.memory_space<vmem>>, vector<1x128xf32>
    %14 = vector.broadcast %13 : vector<1x128xf32> to vector<16x128xf32>
    %15 = arith.addf %12, %14 : vector<16x128xf32>
    %c0_12 = arith.constant 0 : index
    %c0_13 = arith.constant 0 : index
    %16 = vector.load %arg6[%c0_12, %c0_13] : memref<16x128xf32, #tpu.memory_space<vmem>>, vector<16x128xf32>
    tpu.vector_store %arg6[%c0_12, %c0_13], %15 {strides = array<i32>} : memref<16x128xf32, #tpu.memory_space<vmem>>, vector<16x128xf32>,
    return
  }
  func.func @transform_0(%arg0: i32) -> (i32, i32) {
    %c0_i32 = arith.constant 0 : i32
    %c0_i32_0 = arith.constant 0 : i32
    return %arg0, %c0_i32 : i32, i32
  }
  func.func @transform_1(%arg0: i32) -> (i32, i32) {
    %c0_i32 = arith.constant 0 : i32
    %c0_i32_0 = arith.constant 0 : i32
    %c0_i32_1 = arith.constant 0 : i32
    return %c0_i32, %c0_i32_0 : i32, i32
  }
  func.func @transform_2(%arg0: i32) -> (i32, i32) {
    %c0_i32 = arith.constant 0 : i32
    %c0_i32_0 = arith.constant 0 : i32
    %c0_i32_1 = arith.constant 0 : i32
    return %c0_i32, %c0_i32_0 : i32, i32
  }
  func.func @transform_3(%arg0: i32) -> (i32, i32) {
    %c0_i32 = arith.constant 0 : i32
    %c0_i32_0 = arith.constant 0 : i32
    %c0_i32_1 = arith.constant 0 : i32
    return %c0_i32, %c0_i32_0 : i32, i32
  }
  func.func @transform_4(%arg0: i32) -> (i32, i32) {
    %c0_i32 = arith.constant 0 : i32
    %c0_i32_0 = arith.constant 0 : i32
    %c0_i32_1 = arith.constant 0 : i32
    return %c0_i32, %c0_i32_0 : i32, i32
  }
  func.func @transform_5(%arg0: i32) -> (i32, i32) {
    %c0_i32 = arith.constant 0 : i32
    %c0_i32_0 = arith.constant 0 : i32
    return %arg0, %c0_i32 : i32, i32
  }
}

</mosaic_0001>

<llo_original>
// kernel: tpu_custom_call.1
$region0: #{tpu_custom_call.1}
  #allocation0 [shape = 'u32[]', space=smem, size = 0x4, offset = 0x4, fixed_abs, tag = 'smem constant byte address 0x4 - core index']
  #allocation1 [shape = 'u32[144,128]{1,0:T(1,128)}', space=vmem, size = 0x12000, scoped, tag = 'internal scratch']
  %s0 = inlined_call_operand.hbm [shape: f32[16,22], index: 0, kind: input, shape index: {}]
  %s1 = inlined_call_operand.hbm [shape: f32[22,64], index: 1, kind: input, shape index: {}]
  %s2 = inlined_call_operand.vmem [shape: f32[1,64], index: 2, kind: input, shape index: {}]
  %s3 = inlined_call_operand.hbm [shape: f32[64,128], index: 3, kind: input, shape index: {}]
  %s4 = inlined_call_operand.vmem [shape: f32[1,128], index: 4, kind: input, shape index: {}]
  %s5 = inlined_call_operand.hbm [shape: f32[16,128], index: 5, kind: output, shape index: {}]
  %s6 = sld [smem:[#allocation0]]
  $region42: #{tpu_custom_call.1} parent=0
    _
  %s8 = ssub.s32 1, %s6
  %s9 = scalar_select 0, %s8, %s6
  $region1: #{tpu_custom_call.1} parent=0
    #allocation2 [shape = 'u8[8192]{0}', space=vmem, size = 0x2000, scoped, tag = 'input window, operand 0, single buffered']
    #allocation3 [shape = 's32[1]{0}', space=sflag, size = 0x4, scoped, tag = 'scoped memory for tpu_custom_call.1']
    #allocation4 [shape = 's32[1]{0}', space=sflag, size = 0x4, scoped, tag = 'scoped memory for tpu_custom_call.1']
    #allocation5 [shape = 'u8[12288]{0}', space=vmem, size = 0x3000, scoped, tag = 'input window, operand 1, single buffered']
    #allocation6 [shape = 's32[1]{0}', space=sflag, size = 0x4, scoped, tag = 'scoped memory for tpu_custom_call.1']
    #allocation7 [shape = 'u8[32768]{0}', space=vmem, size = 0x8000, scoped, tag = 'input window, operand 3, single buffered']
    #allocation8 [shape = 'u8[8192]{0}', space=vmem, size = 0x2000, scoped, tag = 'output window, operand 0, single buffered']
    %10 = vsyncpa [#allocation3], 0
    %11 = vsyncpa [#allocation6], 0
    %12 = vsyncpa [#allocation4], 0
    // Predicated region
    $region2: #{tpu_custom_call.1} parent=1 // pred_check
      _
    $region3: #{tpu_custom_call.1} parent=1 // pred_check_branch
      %14 = sbr.rel (0) target = $region5
    $region4: #{tpu_custom_call.1} parent=1 // pred_region
      %s16 = ssub.s32 256, 256
      %17 = vsyncadd [#allocation3], %s16
      %s18 = sshll.u32 [#allocation2], 4
      %s19 = int_to_ptr.vmem [resolvable:$true] %s18
      %24 = dma.hbm_to_vmem [thread:$0]  %s0, 256, %s19, [#allocation3], 128, 128, 8
    $region5: #{tpu_custom_call.1} parent=1 // pred_fallthru
      _
    // Predicated region
    $region6: #{tpu_custom_call.1} parent=1 // pred_check
      _
    $region7: #{tpu_custom_call.1} parent=1 // pred_check_branch
      %26 = sbr.rel (0) target = $region9
    $region8: #{tpu_custom_call.1} parent=1 // pred_region
      %s28 = ssub.s32 384, 384
      %29 = vsyncadd [#allocation6], %s28
      %s30 = sshll.u32 [#allocation5], 4
      %s31 = int_to_ptr.vmem [resolvable:$true] %s30
      %36 = dma.hbm_to_vmem [thread:$0]  %s1, 384, %s31, [#allocation6], 128, 128, 8
    $region9: #{tpu_custom_call.1} parent=1 // pred_fallthru
      _
    // Predicated region
    $region10: #{tpu_custom_call.1} parent=1 // pred_check
      _
    $region11: #{tpu_custom_call.1} parent=1 // pred_check_branch
      %38 = sbr.rel (0) target = $region13
    $region12: #{tpu_custom_call.1} parent=1 // pred_region
      _
    $region13: #{tpu_custom_call.1} parent=1 // pred_fallthru
      _
    // Predicated region
    $region14: #{tpu_custom_call.1} parent=1 // pred_check
      _
    $region15: #{tpu_custom_call.1} parent=1 // pred_check_branch
      %40 = sbr.rel (0) target = $region17
    $region16: #{tpu_custom_call.1} parent=1 // pred_region
      %s42 = ssub.s32 1024, 1024
      %43 = vsyncadd [#allocation6], %s42
      %s44 = sshll.u32 [#allocation7], 4
      %s45 = int_to_ptr.vmem [resolvable:$true] %s44
      %50 = dma.hbm_to_vmem [thread:$0]  %s3, 1024, %s45, [#allocation6], 128, 128, 8
    $region17: #{tpu_custom_call.1} parent=1 // pred_fallthru
      _
    // Predicated region
    $region18: #{tpu_custom_call.1} parent=1 // pred_check
      _
    $region19: #{tpu_custom_call.1} parent=1 // pred_check_branch
      %52 = sbr.rel (0) target = $region21
    $region20: #{tpu_custom_call.1} parent=1 // pred_region
      _
    $region21: #{tpu_custom_call.1} parent=1 // pred_fallthru
      _
    // Predicated region
    $region22: #{tpu_custom_call.1} parent=1 // pred_check
      _
    $region23: #{tpu_custom_call.1} parent=1 // pred_check_branch
      %54 = sbr.rel (0) target = $region25
    $region24: #{tpu_custom_call.1} parent=1 // pred_region
      %55 = dma.done [#allocation3], 256
    $region25: #{tpu_custom_call.1} parent=1 // pred_fallthru
      _
    // Predicated region
    $region26: #{tpu_custom_call.1} parent=1 // pred_check
      _
    $region27: #{tpu_custom_call.1} parent=1 // pred_check_branch
      %57 = sbr.rel (0) target = $region29
    $region28: #{tpu_custom_call.1} parent=1 // pred_region
      %58 = dma.done [#allocation6], 384
    $region29: #{tpu_custom_call.1} parent=1 // pred_fallthru
      _
    // Predicated region
    $region30: #{tpu_custom_call.1} parent=1 // pred_check
      _
    $region31: #{tpu_custom_call.1} parent=1 // pred_check_branch
      %60 = sbr.rel (0) target = $region33
    $region32: #{tpu_custom_call.1} parent=1 // pred_region
      %61 = dma.done [#allocation6], 1024
    $region33: #{tpu_custom_call.1} parent=1 // pred_fallthru
      _
    %v62 = vld [vmem:[#allocation2] sm:$0xff]
    %v63 = vld [vmem:[#allocation2 + $0x8] sm:$0xff]
    %v64 = vld [vmem:[#allocation5] sm:$0xff]
    %v65 = vld [vmem:[#allocation5 + $0x8] sm:$0xff]
    %v66 = vld [vmem:[#allocation5 + $0x10] sm:$0x3f]
    %v67 = vld [vmem:[%s2] sm:$0x1]
    %v69 = vlaneseq
    %v70 = vshrl.u32 %v69, 7
    %v71 = vsub.s32 0, %v70
    %v72 = vrot.slane %v67, %v71
    %vm74 = vcmask 179200
    %v76 = vsel %vm74, %v62, 0
    %v79 = vsel %vm74, %v63, 0
    %vm81 = vcmask 1045504
    %v83 = vsel %vm81, %v66, 0
    %85 = vmatprep.subr.mxu0 0.0
    %86 = vmatpush1.msra.mxu0 %v64
    %87 = vmatprep.subr.mxu0 0.0
    %88 = vmatpush1.msra.mxu0 %v65
    %89 = vmatprep.subr.mxu0 0.0
    %90 = vmatpush1.msra.mxu0 %v83
    %91 = vmatprep.subr.mxu0 0.0
    %92 = vmatpush1.msra.mxu0 0.0
    %93 = vmatprep.subr.mxu0 0.0
    %94 = vmatpush1.msra.mxu0 0.0
    %95 = vmatprep.subr.mxu0 0.0
    %96 = vmatpush1.msra.mxu0 0.0
    %97 = vmatprep.subr.mxu0 0.0
    %98 = vmatpush1.msra.mxu0 0.0
    %99 = vmatprep.subr.mxu0 0.0
    %100 = vmatpush1.msra.mxu0 0.0
    %101 = vmatprep.subr.mxu0 0.0
    %102 = vmatpush1.msra.mxu0 0.0
    %103 = vmatprep.subr.mxu0 0.0
    %104 = vmatpush1.msra.mxu0 0.0
    %105 = vmatprep.subr.mxu0 0.0
    %106 = vmatpush1.msra.mxu0 0.0
    %107 = vmatprep.subr.mxu0 0.0
    %108 = vmatpush1.msra.mxu0 0.0
    %109 = vmatprep.subr.mxu0 0.0
    %110 = vmatpush1.msra.mxu0 0.0
    %111 = vmatprep.subr.mxu0 0.0
    %112 = vmatpush1.msra.mxu0 0.0
    %113 = vmatprep.subr.mxu0 0.0
    %114 = vmatpush1.msra.mxu0 0.0
    %115 = vmatprep.subr.mxu0 0.0
    %116 = vmatpush1.msra.mxu0 0.0
    %117 = vmatprep.subr.mxu0 0.0
    %118 = vmatpush1.msra.mxu0 0.0
    %119 = vmatprep.subr.mxu0 0.0
    %120 = vmatpush1.msra.mxu0 0.0
    %121 = vmatprep.subr.mxu0 0.0
    %122 = vmatpush1.msra.mxu0 0.0
    %123 = vmatprep.subr.mxu0 0.0
    %124 = vmatpush1.msra.mxu0 0.0
    %125 = vmatprep.subr.mxu0 0.0
    %126 = vmatpush1.msra.mxu0 0.0
    %127 = vmatprep.subr.mxu0 0.0
    %128 = vmatpush1.msra.mxu0 0.0
    %129 = vmatprep.subr.mxu0 0.0
    %130 = vmatpush1.msra.mxu0 0.0
    %131 = vmatprep.subr.mxu0 0.0
    %132 = vmatpush1.msra.mxu0 0.0
    %133 = vmatprep.subr.mxu0 0.0
    %134 = vmatpush1.msra.mxu0 0.0
    %135 = vmatprep.subr.mxu0 0.0
    %136 = vmatpush1.msra.mxu0 0.0
    %137 = vmatprep.subr.mxu0 0.0
    %138 = vmatpush1.msra.mxu0 0.0
    %139 = vmatprep.subr.mxu0 0.0
    %140 = vmatpush1.msra.mxu0 0.0
    %141 = vmatprep.subr.mxu0 0.0
    %142 = vmatpush1.msra.mxu0 0.0
    %143 = vmatprep.subr.mxu0 0.0
    %144 = vmatpush1.msra.mxu0 0.0
    %145 = vmatprep.subr.mxu0 0.0
    %146 = vmatpush1.msra.mxu0 0.0
    %147 = vmatprep.subr.mxu0 0.0
    %148 = vmatpush1.msra.mxu0 0.0
    %149 = vmatprep.mubr.f32.mxu0 0.0
    %150 = vmatmul.mubr.f32.gmra.mrb[0].mxu0 %v76
    %v151 = vpop.f32.mrb[0].mxu0
    %v152 = vadd.f32 %v72, %v151
    %v153 = vpop.f32.mrb[0].mxu0
    %154 = vmatprep.mubr.f32.mxu0 0.0
    %155 = vmatmul.mubr.f32.gmra.mrb[0].mxu0 %v79
    %v156 = vpop.f32.mrb[0].mxu0
    %v157 = vadd.f32 %v72, %v156
    %v158 = vpop.f32.mrb[0].mxu0
    %159 = vdwg.mxu0
    %vm160 = vcmp.gt.f32.partialorder %v152, 0.0
    %vm161 = vcmp.gt.f32.partialorder %v157, 0.0
    %v162 = vmul.f32 %v152, 0.01
    %v163 = vmul.f32 %v157, 0.01
    %v164 = vsel %vm160, %v152, %v162
    %v165 = vsel %vm161, %v157, %v163
    %v166 = vld [vmem:[#allocation7] sm:$0xff]
    %v167 = vld [vmem:[#allocation7 + $0x8] sm:$0xff]
    %v168 = vld [vmem:[#allocation7 + $0x10] sm:$0xff]
    %v169 = vld [vmem:[#allocation7 + $0x18] sm:$0xff]
    %v170 = vld [vmem:[#allocation7 + $0x20] sm:$0xff]
    %v171 = vld [vmem:[#allocation7 + $0x28] sm:$0xff]
    %v172 = vld [vmem:[#allocation7 + $0x30] sm:$0xff]
    %v173 = vld [vmem:[#allocation7 + $0x38] sm:$0xff]
    %v174 = vld [vmem:[%s4] sm:$0x1]
    %v176 = vlaneseq
    %v177 = vshrl.u32 %v176, 7
    %v178 = vsub.s32 0, %v177
    %v179 = vrot.slane %v174, %v178
    %vm181 = vcmask 523264
    %v183 = vsel %vm181, %v164, 0
    %v186 = vsel %vm181, %v165, 0
    %188 = vmatprep.subr.mxu0 0.0
    %189 = vmatpush1.msra.mxu0 %v166
    %190 = vmatprep.subr.mxu0 0.0
    %191 = vmatpush1.msra.mxu0 %v167
    %192 = vmatprep.subr.mxu0 0.0
    %193 = vmatpush1.msra.mxu0 %v168
    %194 = vmatprep.subr.mxu0 0.0
    %195 = vmatpush1.msra.mxu0 %v169
    %196 = vmatprep.subr.mxu0 0.0
    %197 = vmatpush1.msra.mxu0 %v170
    %198 = vmatprep.subr.mxu0 0.0
    %199 = vmatpush1.msra.mxu0 %v171
    %200 = vmatprep.subr.mxu0 0.0
    %201 = vmatpush1.msra.mxu0 %v172
    %202 = vmatprep.subr.mxu0 0.0
    %203 = vmatpush1.msra.mxu0 %v173
    %204 = vmatprep.subr.mxu0 0.0
    %205 = vmatpush1.msra.mxu0 0.0
    %206 = vmatprep.subr.mxu0 0.0
    %207 = vmatpush1.msra.mxu0 0.0
    %208 = vmatprep.subr.mxu0 0.0
    %209 = vmatpush1.msra.mxu0 0.0
    %210 = vmatprep.subr.mxu0 0.0
    %211 = vmatpush1.msra.mxu0 0.0
    %212 = vmatprep.subr.mxu0 0.0
    %213 = vmatpush1.msra.mxu0 0.0
    %214 = vmatprep.subr.mxu0 0.0
    %215 = vmatpush1.msra.mxu0 0.0
    %216 = vmatprep.subr.mxu0 0.0
    %217 = vmatpush1.msra.mxu0 0.0
    %218 = vmatprep.subr.mxu0 0.0
    %219 = vmatpush1.msra.mxu0 0.0
    %220 = vmatprep.subr.mxu0 0.0
    %221 = vmatpush1.msra.mxu0 0.0
    %222 = vmatprep.subr.mxu0 0.0
    %223 = vmatpush1.msra.mxu0 0.0
    %224 = vmatprep.subr.mxu0 0.0
    %225 = vmatpush1.msra.mxu0 0.0
    %226 = vmatprep.subr.mxu0 0.0
    %227 = vmatpush1.msra.mxu0 0.0
    %228 = vmatprep.subr.mxu0 0.0
    %229 = vmatpush1.msra.mxu0 0.0
    %230 = vmatprep.subr.mxu0 0.0
    %231 = vmatpush1.msra.mxu0 0.0
    %232 = vmatprep.subr.mxu0 0.0
    %233 = vmatpush1.msra.mxu0 0.0
    %234 = vmatprep.subr.mxu0 0.0
    %235 = vmatpush1.msra.mxu0 0.0
    %236 = vmatprep.subr.mxu0 0.0
    %237 = vmatpush1.msra.mxu0 0.0
    %238 = vmatprep.subr.mxu0 0.0
    %239 = vmatpush1.msra.mxu0 0.0
    %240 = vmatprep.subr.mxu0 0.0
    %241 = vmatpush1.msra.mxu0 0.0
    %242 = vmatprep.subr.mxu0 0.0
    %243 = vmatpush1.msra.mxu0 0.0
    %244 = vmatprep.subr.mxu0 0.0
    %245 = vmatpush1.msra.mxu0 0.0
    %246 = vmatprep.subr.mxu0 0.0
    %247 = vmatpush1.msra.mxu0 0.0
    %248 = vmatprep.subr.mxu0 0.0
    %249 = vmatpush1.msra.mxu0 0.0
    %250 = vmatprep.subr.mxu0 0.0
    %251 = vmatpush1.msra.mxu0 0.0
    %252 = vmatprep.mubr.f32.mxu0 0.0
    %253 = vmatmul.mubr.f32.gmra.mrb[0].mxu0 %v183
    %v254 = vpop.f32.mrb[0].mxu0
    %v255 = vadd.f32 %v179, %v254
    %v256 = vpop.f32.mrb[0].mxu0
    %257 = vmatprep.mubr.f32.mxu0 0.0
    %258 = vmatmul.mubr.f32.gmra.mrb[0].mxu0 %v186
    %v259 = vpop.f32.mrb[0].mxu0
    %v260 = vadd.f32 %v179, %v259
    %v261 = vpop.f32.mrb[0].mxu0
    %262 = vdwg.mxu0
    %263 = vst [vmem:[#allocation8] sm:$0xff] %v255
    %264 = vst [vmem:[#allocation8 + $0x8] sm:$0xff] %v260
    // Predicated region
    $region34: #{tpu_custom_call.1} parent=1 // pred_check
      _
    $region35: #{tpu_custom_call.1} parent=1 // pred_check_branch
      %266 = sbr.rel (0) target = $region37
    $region36: #{tpu_custom_call.1} parent=1 // pred_region
      %s268 = ssub.s32 256, 256
      %269 = vsyncadd [#allocation4], %s268
      %s270 = sshll.u32 [#allocation8], 4
      %s271 = int_to_ptr.vmem [resolvable:$true] %s270
      %276 = dma.vmem_to_hbm [thread:$0]  %s271, 256, %s5, [#allocation4], 128, 128, 8
    $region37: #{tpu_custom_call.1} parent=1 // pred_fallthru
      _
    // Predicated region
    $region38: #{tpu_custom_call.1} parent=1 // pred_check
      _
    $region39: #{tpu_custom_call.1} parent=1 // pred_check_branch
      %278 = sbr.rel (0) target = $region41
    $region40: #{tpu_custom_call.1} parent=1 // pred_region
      %279 = dma.done [#allocation4], 256
    $region41: #{tpu_custom_call.1} parent=1 // pred_fallthru
      _
    %280 = vsyncpa [#allocation3], 1
    %281 = vsyncpa [#allocation6], 1
    %282 = vsyncpa [#allocation4], 1

</llo_original>
